<compile_context>
chip_gen: v7x
topology: tpu7x:2x2x1
jax: 0.10.0
libtpu: 0.0.40
codegen_flags: <defaults>
</compile_context>

<pallas_src>
import functools

import jax
import jax.numpy as jnp
from jax import lax
from jax.experimental import pallas as pl
from jax.experimental.pallas import tpu as pltpu

BN_EPS = 1e-5


def _largest_divisor_at_most(n, cap):
    for d in range(min(n, cap), 0, -1):
        if n % d == 0:
            return d
    return 1


def _fill_padded(x_ref, xpad_ref, pad):
    """Copy the x block into the scratch interior; zero ONLY the pad lanes."""
    bn, c_in, l_in = x_ref.shape
    if pad > 0:
        zcol = jnp.zeros((bn, c_in, pad), xpad_ref.dtype)
        xpad_ref[:, :, 0:pad] = zcol                                   # left pad
        xpad_ref[:, :, pad + l_in:pad + l_in + pad] = zcol             # right pad
    xpad_ref[:, :, pad:pad + l_in] = x_ref[...].astype(xpad_ref.dtype)


def _conv_block(xpad_ref, w_ref, l_out):
    """Conv1d (stride=1) of one (Bn, C_in, L) block as C_in*K VPU broadcast FMAs.

    Channel counts (4 -> 8) are far too small to feed the MXU, so the conv is
    kept on the VPU with L staying on the lane axis throughout.
    """
    c_in, k_taps, c_out, _ = w_ref.shape
    bn = xpad_ref.shape[0]
    acc = jnp.zeros((bn, c_out, l_out), jnp.float32)
    for ci in range(c_in):
        for k in range(k_taps):
            tap = xpad_ref[:, ci, k:k + l_out]            # (Bn, L_out) lane slice
            w_cik = w_ref[ci, k]                          # (C_out, 1)
            acc = acc + w_cik[None] * tap[:, None, :]     # (Bn, C_out, L_out)
    return acc


def conv_stats_kernel(x_ref, w_ref, s1_ref, s2_ref, xpad_ref, *, pad, l_out):
    # x_ref : (Bn, C_in, L)     w_ref: (C_in, K, C_out, 1)
    # s1_ref/s2_ref: (1, C_out, 1) per-grid-step PARTIAL sums (no shared
    # accumulator -> the grid axis is safely "parallel" on multi-TC chips).
    _fill_padded(x_ref, xpad_ref, pad)
    acc = _conv_block(xpad_ref, w_ref, l_out)             # (Bn, C_out, L_out) f32

    # fold the Bn axis with plain vreg adds, then a single lane reduction
    row = acc[0]
    rowsq = acc[0] * acc[0]
    for b in range(1, acc.shape[0]):
        a_b = acc[b]
        row = row + a_b
        rowsq = rowsq + a_b * a_b
    s1_ref[...] = jnp.sum(row, axis=1, keepdims=True)[None]     # (1, C_out, 1)
    s2_ref[...] = jnp.sum(rowsq, axis=1, keepdims=True)[None]


def conv_bn_relu_kernel(x_ref, w_ref, scale_ref, shift_ref, o_ref, xpad_ref,
                        *, pad, l_out):
    # Recompute the conv (~2*C_in*K VPU ops/element) instead of reloading a
    # stored intermediate, then one FMA + max per element; lane-dense NCL store.
    _fill_padded(x_ref, xpad_ref, pad)
    acc = _conv_block(xpad_ref, w_ref, l_out)              # (Bn, C_out, L_out)
    y = acc * scale_ref[...][None] + shift_ref[...][None]
    o_ref[...] = jnp.maximum(y, 0.0).astype(o_ref.dtype)


def _vmem_limit_bytes(bn, c_in, c_out, k, l, pad):
    f32 = 4
    per_step = f32 * (bn * c_in * l                 # x block
                      + bn * c_in * (l + 2 * pad)   # pad scratch
                      + bn * c_out * l              # output block
                      + c_in * k * c_out            # weights
                      + 4 * c_out)                  # stats / scale / shift
    # double-buffered in/out + headroom; cap below v7x's 64 MiB physical VMEM
    return int(min(max(4 * per_step + (1 << 20), 16 << 20), 48 << 20))


def conv1d_bn_relu(x, weight, gamma, beta, *, padding=1):
    """x: (N, C_in, L), weight: (C_out, C_in, K), gamma/beta: (C_out,).

    Matches torch: Conv1d(bias=False, stride=1) -> BatchNorm1d (training batch
    stats) -> ReLU.  Specialised to the module's default 'same' configuration.
    """
    N, C_in, L = x.shape
    C_out, _, K = weight.shape
    # TODO(synk): stride > 1 / non-'same' padding not implemented (module
    # defaults are kernel_size=3, stride=1, padding=1).
    assert 2 * padding == K - 1, "kernel specialised to 'same' conv (k=3,s=1,p=1)"
    L_out = L + 2 * padding - K + 1

    x = x.astype(jnp.float32)
    # (C_out, C_in, K) -> (C_in, K, C_out, 1): per (ci, k) a (C_out, 1) column
    # broadcast against an L-lane tap on the VPU.  Tiny tensor.
    w_t = jnp.transpose(weight, (1, 2, 0)).astype(jnp.float32)[..., None]

    # Batch elements per grid step: fill >= 8 sublanes (Bn*C_in) and amortize
    # the ~0.35 us per-grid-step overhead.  For the toy shape this makes a
    # single grid step cover the whole tensor.
    Bn = _largest_divisor_at_most(N, 8)
    n_blocks = N // Bn

    x_spec = pl.BlockSpec((Bn, C_in, L), lambda i: (i, 0, 0))
    w_spec = pl.BlockSpec((C_in, K, C_out, 1), lambda i: (0, 0, 0, 0))
    stat_spec = pl.BlockSpec((1, C_out, 1), lambda i: (i, 0, 0))
    out_spec = pl.BlockSpec((Bn, C_out, L_out), lambda i: (i, 0, 0))
    vmem_limit = _vmem_limit_bytes(Bn, C_in, C_out, K, L, padding)

    # ---- pass 1: per-block partial BN statistics (no conv stored to HBM) ----
    s1, s2 = pl.pallas_call(
        functools.partial(conv_stats_kernel, pad=padding, l_out=L_out),
        out_shape=(
            jax.ShapeDtypeStruct((n_blocks, C_out, 1), jnp.float32),
            jax.ShapeDtypeStruct((n_blocks, C_out, 1), jnp.float32),
        ),
        grid_spec=pltpu.PrefetchScalarGridSpec(
            num_scalar_prefetch=0,
            grid=(n_blocks,),
            in_specs=[x_spec, w_spec],
            out_specs=(stat_spec, stat_spec),
            scratch_shapes=[
                pltpu.VMEM((Bn, C_in, L + 2 * padding), jnp.float32),
            ],
        ),
        # every step writes its own partial-stat block -> race-free "parallel"
        # (shards across v7x's two TensorCores; no-op on v5e/v6e).
        compiler_params=pltpu.CompilerParams(
            dimension_semantics=("parallel",),
            vmem_limit_bytes=vmem_limit),
    )(x, w_t)

    # ---- tiny JAX glue: reduce partials, fold BN stats + affine -------------
    cnt = jnp.float32(N * L_out)
    mean = jnp.sum(s1[:, :, 0], axis=0) / cnt
    var = jnp.sum(s2[:, :, 0], axis=0) / cnt - mean * mean
    var = jnp.maximum(var, 0.0)                      # cancellation guard
    inv_std = lax.rsqrt(var + BN_EPS)
    scale = gamma.astype(jnp.float32) * inv_std
    shift = beta.astype(jnp.float32) - mean * scale

    # ---- pass 2: recompute conv + scale/shift + ReLU, lane-dense NCL store --
    out = pl.pallas_call(
        functools.partial(conv_bn_relu_kernel, pad=padding, l_out=L_out),
        out_shape=jax.ShapeDtypeStruct((N, C_out, L_out), jnp.float32),
        grid_spec=pltpu.PrefetchScalarGridSpec(
            num_scalar_prefetch=0,
            grid=(n_blocks,),
            in_specs=[
                x_spec, w_spec,
                pl.BlockSpec((C_out, 1), lambda i: (0, 0)),
                pl.BlockSpec((C_out, 1), lambda i: (0, 0)),
            ],
            out_specs=out_spec,
            scratch_shapes=[
                pltpu.VMEM((Bn, C_in, L + 2 * padding), jnp.float32),
            ],
        ),
        compiler_params=pltpu.CompilerParams(
            dimension_semantics=("parallel",),
            vmem_limit_bytes=vmem_limit),
    )(x, w_t, scale.reshape(C_out, 1), shift.reshape(C_out, 1))

    # TODO(synk): BatchNorm running_mean/running_var buffer updates are a
    # training-time side effect only and are not materialized here.
    return out


def _reference(x, weight, gamma, beta, *, padding=1):
    """Pure-JAX reference (same semantics as the torch module in train mode)."""
    conv = lax.conv_general_dilated(
        x, weight, window_strides=(1,), padding=[(padding, padding)],
        dimension_numbers=("NCH", "OIH", "NCH"))
    mean = jnp.mean(conv, axis=(0, 2), keepdims=True)
    var = jnp.mean((conv - mean) ** 2, axis=(0, 2), keepdims=True)
    norm = (conv - mean) * lax.rsqrt(var + BN_EPS)
    out = norm * gamma.reshape(1, -1, 1) + beta.reshape(1, -1, 1)
    return jnp.maximum(out, 0.0)


if __name__ == "__main__":
    # Conv1d(in=4, out=8, k=3, s=1, p=1, bias=False); BatchNorm1d(8) defaults.
    N, C_in, C_out, L, K = 2, 4, 8, 16, 3
    key = jax.random.PRNGKey(0)
    kx, kw = jax.random.split(key)

    x = jax.random.normal(kx, (N, C_in, L), dtype=jnp.float32)
    fan_in = C_in * K
    weight = jax.random.uniform(
        kw, (C_out, C_in, K), dtype=jnp.float32,
        minval=-(fan_in ** -0.5), maxval=fan_in ** -0.5)
    gamma = jnp.ones((C_out,), jnp.float32)   # BatchNorm1d default init
    beta = jnp.zeros((C_out,), jnp.float32)

    out = conv1d_bn_relu(x, weight, gamma, beta, padding=1)
    out = jax.block_until_ready(out)

    ref = _reference(x, weight, gamma, beta, padding=1)
    assert out.shape == (N, C_out, L), out.shape
    assert jnp.allclose(out, ref, atol=1e-4, rtol=1e-4), "mismatch vs reference"
    print("KERNEL_OK")
</pallas_src>

<mosaic_0001>
module attributes {stable_mosaic.version = 11 : i64} {
  func.func @conv_stats_kernel(%arg0: i32, %arg1: memref<2x4x16xf32, #tpu.memory_space<vmem>>, %arg2: memref<4x3x8x1xf32, #tpu.memory_space<vmem>>, %arg3: memref<1x8x1xf32, #tpu.memory_space<vmem>>, %arg4: memref<1x8x1xf32, #tpu.memory_space<vmem>>, %arg5: memref<2x4x18xf32, #tpu.memory_space<vmem>>) attributes {dimension_semantics = [#tpu.dimension_semantics<parallel>], iteration_bounds = array<i64: 1>, scalar_prefetch = 0 : i64, scratch_operands = 1 : i64, tpu.core_type = #tpu.core_type<tc>, window_params = [{transform_indices = @transform_0, window_bounds = array<i64: 2, 4, 16>}, {pipeline_mode = #tpu.pipeline_mode<synchronous>, transform_indices = @transform_1, window_bounds = array<i64: 4, 3, 8, 1>}, {transform_indices = @transform_2, window_bounds = array<i64: 1, 8, 1>}, {transform_indices = @transform_3, window_bounds = array<i64: 1, 8, 1>}]} {
    %cst = arith.constant 0.000000e+00 : f32
    %0 = vector.broadcast %cst : f32 to vector<2x4x1xf32>
    %c0 = arith.constant 0 : index
    %c0_0 = arith.constant 0 : index
    %c0_1 = arith.constant 0 : index
    %1 = vector.load %arg5[%c0, %c0_0, %c0_1] : memref<2x4x18xf32, #tpu.memory_space<vmem>>, vector<2x4x1xf32>
    tpu.vector_store %arg5[%c0, %c0_0, %c0_1], %0 {strides = array<i32>} : memref<2x4x18xf32, #tpu.memory_space<vmem>>, vector<2x4x1xf32>,
    %c0_2 = arith.constant 0 : index
    %c0_3 = arith.constant 0 : index
    %c17 = arith.constant 17 : index
    %2 = vector.load %arg5[%c0_2, %c0_3, %c17] : memref<2x4x18xf32, #tpu.memory_space<vmem>>, vector<2x4x1xf32>
    tpu.vector_store %arg5[%c0_2, %c0_3, %c17], %0 {strides = array<i32>} : memref<2x4x18xf32, #tpu.memory_space<vmem>>, vector<2x4x1xf32>,
    %c0_4 = arith.constant 0 : index
    %c0_5 = arith.constant 0 : index
    %c0_6 = arith.constant 0 : index
    %3 = vector.load %arg1[%c0_4, %c0_5, %c0_6] : memref<2x4x16xf32, #tpu.memory_space<vmem>>, vector<2x4x16xf32>
    %c0_7 = arith.constant 0 : index
    %c0_8 = arith.constant 0 : index
    %c1 = arith.constant 1 : index
    %4 = vector.load %arg5[%c0_7, %c0_8, %c1] : memref<2x4x18xf32, #tpu.memory_space<vmem>>, vector<2x4x16xf32>
    tpu.vector_store %arg5[%c0_7, %c0_8, %c1], %3 {strides = array<i32>} : memref<2x4x18xf32, #tpu.memory_space<vmem>>, vector<2x4x16xf32>,
    %cst_9 = arith.constant 0.000000e+00 : f32
    %5 = vector.broadcast %cst_9 : f32 to vector<2x8x16xf32>
    %c0_10 = arith.constant 0 : index
    %c0_11 = arith.constant 0 : index
    %c0_12 = arith.constant 0 : index
    %6 = vector.load %arg5[%c0_10, %c0_11, %c0_12] : memref<2x4x18xf32, #tpu.memory_space<vmem>>, vector<2x1x16xf32>
    %7 = vector.shape_cast %6 : vector<2x1x16xf32> to vector<2x16xf32>
    %c0_13 = arith.constant 0 : index
    %c0_14 = arith.constant 0 : index
    %c0_15 = arith.constant 0 : index
    %c0_16 = arith.constant 0 : index
    %8 = vector.load %arg2[%c0_13, %c0_14, %c0_15, %c0_16] : memref<4x3x8x1xf32, #tpu.memory_space<vmem>>, vector<1x1x8x1xf32>
    %9 = vector.shape_cast %8 : vector<1x1x8x1xf32> to vector<8x1xf32>
    %10 = vector.shape_cast %9 : vector<8x1xf32> to vector<1x8x1xf32>
    %11 = vector.shape_cast %7 : vector<2x16xf32> to vector<2x1x16xf32>
    %12 = vector.broadcast %10 : vector<1x8x1xf32> to vector<2x8x16xf32>
    %13 = vector.broadcast %11 : vector<2x1x16xf32> to vector<2x8x16xf32>
    %14 = arith.mulf %12, %13 : vector<2x8x16xf32>
    %15 = arith.addf %5, %14 : vector<2x8x16xf32>
    %c0_17 = arith.constant 0 : index
    %c0_18 = arith.constant 0 : index
    %c1_19 = arith.constant 1 : index
    %16 = vector.load %arg5[%c0_17, %c0_18, %c1_19] : memref<2x4x18xf32, #tpu.memory_space<vmem>>, vector<2x1x16xf32>
    %17 = vector.shape_cast %16 : vector<2x1x16xf32> to vector<2x16xf32>
    %c0_20 = arith.constant 0 : index
    %c1_21 = arith.constant 1 : index
    %c0_22 = arith.constant 0 : index
    %c0_23 = arith.constant 0 : index
    %18 = vector.load %arg2[%c0_20, %c1_21, %c0_22, %c0_23] : memref<4x3x8x1xf32, #tpu.memory_space<vmem>>, vector<1x1x8x1xf32>
    %19 = vector.shape_cast %18 : vector<1x1x8x1xf32> to vector<8x1xf32>
    %20 = vector.shape_cast %19 : vector<8x1xf32> to vector<1x8x1xf32>
    %21 = vector.shape_cast %17 : vector<2x16xf32> to vector<2x1x16xf32>
    %22 = vector.broadcast %20 : vector<1x8x1xf32> to vector<2x8x16xf32>
    %23 = vector.broadcast %21 : vector<2x1x16xf32> to vector<2x8x16xf32>
    %24 = arith.mulf %22, %23 : vector<2x8x16xf32>
    %25 = arith.addf %15, %24 : vector<2x8x16xf32>
    %c0_24 = arith.constant 0 : index
    %c0_25 = arith.constant 0 : index
    %c2 = arith.constant 2 : index
    %26 = vector.load %arg5[%c0_24, %c0_25, %c2] : memref<2x4x18xf32, #tpu.memory_space<vmem>>, vector<2x1x16xf32>
    %27 = vector.shape_cast %26 : vector<2x1x16xf32> to vector<2x16xf32>
    %c0_26 = arith.constant 0 : index
    %c2_27 = arith.constant 2 : index
    %c0_28 = arith.constant 0 : index
    %c0_29 = arith.constant 0 : index
    %28 = vector.load %arg2[%c0_26, %c2_27, %c0_28, %c0_29] : memref<4x3x8x1xf32, #tpu.memory_space<vmem>>, vector<1x1x8x1xf32>
    %29 = vector.shape_cast %28 : vector<1x1x8x1xf32> to vector<8x1xf32>
    %30 = vector.shape_cast %29 : vector<8x1xf32> to vector<1x8x1xf32>
    %31 = vector.shape_cast %27 : vector<2x16xf32> to vector<2x1x16xf32>
    %32 = vector.broadcast %30 : vector<1x8x1xf32> to vector<2x8x16xf32>
    %33 = vector.broadcast %31 : vector<2x1x16xf32> to vector<2x8x16xf32>
    %34 = arith.mulf %32, %33 : vector<2x8x16xf32>
    %35 = arith.addf %25, %34 : vector<2x8x16xf32>
    %c0_30 = arith.constant 0 : index
    %c1_31 = arith.constant 1 : index
    %c0_32 = arith.constant 0 : index
    %36 = vector.load %arg5[%c0_30, %c1_31, %c0_32] : memref<2x4x18xf32, #tpu.memory_space<vmem>>, vector<2x1x16xf32>
    %37 = vector.shape_cast %36 : vector<2x1x16xf32> to vector<2x16xf32>
    %c1_33 = arith.constant 1 : index
    %c0_34 = arith.constant 0 : index
    %c0_35 = arith.constant 0 : index
    %c0_36 = arith.constant 0 : index
    %38 = vector.load %arg2[%c1_33, %c0_34, %c0_35, %c0_36] : memref<4x3x8x1xf32, #tpu.memory_space<vmem>>, vector<1x1x8x1xf32>
    %39 = vector.shape_cast %38 : vector<1x1x8x1xf32> to vector<8x1xf32>
    %40 = vector.shape_cast %39 : vector<8x1xf32> to vector<1x8x1xf32>
    %41 = vector.shape_cast %37 : vector<2x16xf32> to vector<2x1x16xf32>
    %42 = vector.broadcast %40 : vector<1x8x1xf32> to vector<2x8x16xf32>
    %43 = vector.broadcast %41 : vector<2x1x16xf32> to vector<2x8x16xf32>
    %44 = arith.mulf %42, %43 : vector<2x8x16xf32>
    %45 = arith.addf %35, %44 : vector<2x8x16xf32>
    %c0_37 = arith.constant 0 : index
    %c1_38 = arith.constant 1 : index
    %c1_39 = arith.constant 1 : index
    %46 = vector.load %arg5[%c0_37, %c1_38, %c1_39] : memref<2x4x18xf32, #tpu.memory_space<vmem>>, vector<2x1x16xf32>
    %47 = vector.shape_cast %46 : vector<2x1x16xf32> to vector<2x16xf32>
    %c1_40 = arith.constant 1 : index
    %c1_41 = arith.constant 1 : index
    %c0_42 = arith.constant 0 : index
    %c0_43 = arith.constant 0 : index
    %48 = vector.load %arg2[%c1_40, %c1_41, %c0_42, %c0_43] : memref<4x3x8x1xf32, #tpu.memory_space<vmem>>, vector<1x1x8x1xf32>
    %49 = vector.shape_cast %48 : vector<1x1x8x1xf32> to vector<8x1xf32>
    %50 = vector.shape_cast %49 : vector<8x1xf32> to vector<1x8x1xf32>
    %51 = vector.shape_cast %47 : vector<2x16xf32> to vector<2x1x16xf32>
    %52 = vector.broadcast %50 : vector<1x8x1xf32> to vector<2x8x16xf32>
    %53 = vector.broadcast %51 : vector<2x1x16xf32> to vector<2x8x16xf32>
    %54 = arith.mulf %52, %53 : vector<2x8x16xf32>
    %55 = arith.addf %45, %54 : vector<2x8x16xf32>
    %c0_44 = arith.constant 0 : index
    %c1_45 = arith.constant 1 : index
    %c2_46 = arith.constant 2 : index
    %56 = vector.load %arg5[%c0_44, %c1_45, %c2_46] : memref<2x4x18xf32, #tpu.memory_space<vmem>>, vector<2x1x16xf32>
    %57 = vector.shape_cast %56 : vector<2x1x16xf32> to vector<2x16xf32>
    %c1_47 = arith.constant 1 : index
    %c2_48 = arith.constant 2 : index
    %c0_49 = arith.constant 0 : index
    %c0_50 = arith.constant 0 : index
    %58 = vector.load %arg2[%c1_47, %c2_48, %c0_49, %c0_50] : memref<4x3x8x1xf32, #tpu.memory_space<vmem>>, vector<1x1x8x1xf32>
    %59 = vector.shape_cast %58 : vector<1x1x8x1xf32> to vector<8x1xf32>
    %60 = vector.shape_cast %59 : vector<8x1xf32> to vector<1x8x1xf32>
    %61 = vector.shape_cast %57 : vector<2x16xf32> to vector<2x1x16xf32>
    %62 = vector.broadcast %60 : vector<1x8x1xf32> to vector<2x8x16xf32>
    %63 = vector.broadcast %61 : vector<2x1x16xf32> to vector<2x8x16xf32>
    %64 = arith.mulf %62, %63 : vector<2x8x16xf32>
    %65 = arith.addf %55, %64 : vector<2x8x16xf32>
    %c0_51 = arith.constant 0 : index
    %c2_52 = arith.constant 2 : index
    %c0_53 = arith.constant 0 : index
    %66 = vector.load %arg5[%c0_51, %c2_52, %c0_53] : memref<2x4x18xf32, #tpu.memory_space<vmem>>, vector<2x1x16xf32>
    %67 = vector.shape_cast %66 : vector<2x1x16xf32> to vector<2x16xf32>
    %c2_54 = arith.constant 2 : index
    %c0_55 = arith.constant 0 : index
    %c0_56 = arith.constant 0 : index
    %c0_57 = arith.constant 0 : index
    %68 = vector.load %arg2[%c2_54, %c0_55, %c0_56, %c0_57] : memref<4x3x8x1xf32, #tpu.memory_space<vmem>>, vector<1x1x8x1xf32>
    %69 = vector.shape_cast %68 : vector<1x1x8x1xf32> to vector<8x1xf32>
    %70 = vector.shape_cast %69 : vector<8x1xf32> to vector<1x8x1xf32>
    %71 = vector.shape_cast %67 : vector<2x16xf32> to vector<2x1x16xf32>
    %72 = vector.broadcast %70 : vector<1x8x1xf32> to vector<2x8x16xf32>
    %73 = vector.broadcast %71 : vector<2x1x16xf32> to vector<2x8x16xf32>
    %74 = arith.mulf %72, %73 : vector<2x8x16xf32>
    %75 = arith.addf %65, %74 : vector<2x8x16xf32>
    %c0_58 = arith.constant 0 : index
    %c2_59 = arith.constant 2 : index
    %c1_60 = arith.constant 1 : index
    %76 = vector.load %arg5[%c0_58, %c2_59, %c1_60] : memref<2x4x18xf32, #tpu.memory_space<vmem>>, vector<2x1x16xf32>
    %77 = vector.shape_cast %76 : vector<2x1x16xf32> to vector<2x16xf32>
    %c2_61 = arith.constant 2 : index
    %c1_62 = arith.constant 1 : index
    %c0_63 = arith.constant 0 : index
    %c0_64 = arith.constant 0 : index
    %78 = vector.load %arg2[%c2_61, %c1_62, %c0_63, %c0_64] : memref<4x3x8x1xf32, #tpu.memory_space<vmem>>, vector<1x1x8x1xf32>
    %79 = vector.shape_cast %78 : vector<1x1x8x1xf32> to vector<8x1xf32>
    %80 = vector.shape_cast %79 : vector<8x1xf32> to vector<1x8x1xf32>
    %81 = vector.shape_cast %77 : vector<2x16xf32> to vector<2x1x16xf32>
    %82 = vector.broadcast %80 : vector<1x8x1xf32> to vector<2x8x16xf32>
    %83 = vector.broadcast %81 : vector<2x1x16xf32> to vector<2x8x16xf32>
    %84 = arith.mulf %82, %83 : vector<2x8x16xf32>
    %85 = arith.addf %75, %84 : vector<2x8x16xf32>
    %c0_65 = arith.constant 0 : index
    %c2_66 = arith.constant 2 : index
    %c2_67 = arith.constant 2 : index
    %86 = vector.load %arg5[%c0_65, %c2_66, %c2_67] : memref<2x4x18xf32, #tpu.memory_space<vmem>>, vector<2x1x16xf32>
    %87 = vector.shape_cast %86 : vector<2x1x16xf32> to vector<2x16xf32>
    %c2_68 = arith.constant 2 : index
    %c2_69 = arith.constant 2 : index
    %c0_70 = arith.constant 0 : index
    %c0_71 = arith.constant 0 : index
    %88 = vector.load %arg2[%c2_68, %c2_69, %c0_70, %c0_71] : memref<4x3x8x1xf32, #tpu.memory_space<vmem>>, vector<1x1x8x1xf32>
    %89 = vector.shape_cast %88 : vector<1x1x8x1xf32> to vector<8x1xf32>
    %90 = vector.shape_cast %89 : vector<8x1xf32> to vector<1x8x1xf32>
    %91 = vector.shape_cast %87 : vector<2x16xf32> to vector<2x1x16xf32>
    %92 = vector.broadcast %90 : vector<1x8x1xf32> to vector<2x8x16xf32>
    %93 = vector.broadcast %91 : vector<2x1x16xf32> to vector<2x8x16xf32>
    %94 = arith.mulf %92, %93 : vector<2x8x16xf32>
    %95 = arith.addf %85, %94 : vector<2x8x16xf32>
    %c0_72 = arith.constant 0 : index
    %c3 = arith.constant 3 : index
    %c0_73 = arith.constant 0 : index
    %96 = vector.load %arg5[%c0_72, %c3, %c0_73] : memref<2x4x18xf32, #tpu.memory_space<vmem>>, vector<2x1x16xf32>
    %97 = vector.shape_cast %96 : vector<2x1x16xf32> to vector<2x16xf32>
    %c3_74 = arith.constant 3 : index
    %c0_75 = arith.constant 0 : index
    %c0_76 = arith.constant 0 : index
    %c0_77 = arith.constant 0 : index
    %98 = vector.load %arg2[%c3_74, %c0_75, %c0_76, %c0_77] : memref<4x3x8x1xf32, #tpu.memory_space<vmem>>, vector<1x1x8x1xf32>
    %99 = vector.shape_cast %98 : vector<1x1x8x1xf32> to vector<8x1xf32>
    %100 = vector.shape_cast %99 : vector<8x1xf32> to vector<1x8x1xf32>
    %101 = vector.shape_cast %97 : vector<2x16xf32> to vector<2x1x16xf32>
    %102 = vector.broadcast %100 : vector<1x8x1xf32> to vector<2x8x16xf32>
    %103 = vector.broadcast %101 : vector<2x1x16xf32> to vector<2x8x16xf32>
    %104 = arith.mulf %102, %103 : vector<2x8x16xf32>
    %105 = arith.addf %95, %104 : vector<2x8x16xf32>
    %c0_78 = arith.constant 0 : index
    %c3_79 = arith.constant 3 : index
    %c1_80 = arith.constant 1 : index
    %106 = vector.load %arg5[%c0_78, %c3_79, %c1_80] : memref<2x4x18xf32, #tpu.memory_space<vmem>>, vector<2x1x16xf32>
    %107 = vector.shape_cast %106 : vector<2x1x16xf32> to vector<2x16xf32>
    %c3_81 = arith.constant 3 : index
    %c1_82 = arith.constant 1 : index
    %c0_83 = arith.constant 0 : index
    %c0_84 = arith.constant 0 : index
    %108 = vector.load %arg2[%c3_81, %c1_82, %c0_83, %c0_84] : memref<4x3x8x1xf32, #tpu.memory_space<vmem>>, vector<1x1x8x1xf32>
    %109 = vector.shape_cast %108 : vector<1x1x8x1xf32> to vector<8x1xf32>
    %110 = vector.shape_cast %109 : vector<8x1xf32> to vector<1x8x1xf32>
    %111 = vector.shape_cast %107 : vector<2x16xf32> to vector<2x1x16xf32>
    %112 = vector.broadcast %110 : vector<1x8x1xf32> to vector<2x8x16xf32>
    %113 = vector.broadcast %111 : vector<2x1x16xf32> to vector<2x8x16xf32>
    %114 = arith.mulf %112, %113 : vector<2x8x16xf32>
    %115 = arith.addf %105, %114 : vector<2x8x16xf32>
    %c0_85 = arith.constant 0 : index
    %c3_86 = arith.constant 3 : index
    %c2_87 = arith.constant 2 : index
    %116 = vector.load %arg5[%c0_85, %c3_86, %c2_87] : memref<2x4x18xf32, #tpu.memory_space<vmem>>, vector<2x1x16xf32>
    %117 = vector.shape_cast %116 : vector<2x1x16xf32> to vector<2x16xf32>
    %c3_88 = arith.constant 3 : index
    %c2_89 = arith.constant 2 : index
    %c0_90 = arith.constant 0 : index
    %c0_91 = arith.constant 0 : index
    %118 = vector.load %arg2[%c3_88, %c2_89, %c0_90, %c0_91] : memref<4x3x8x1xf32, #tpu.memory_space<vmem>>, vector<1x1x8x1xf32>
    %119 = vector.shape_cast %118 : vector<1x1x8x1xf32> to vector<8x1xf32>
    %120 = vector.shape_cast %119 : vector<8x1xf32> to vector<1x8x1xf32>
    %121 = vector.shape_cast %117 : vector<2x16xf32> to vector<2x1x16xf32>
    %122 = vector.broadcast %120 : vector<1x8x1xf32> to vector<2x8x16xf32>
    %123 = vector.broadcast %121 : vector<2x1x16xf32> to vector<2x8x16xf32>
    %124 = arith.mulf %122, %123 : vector<2x8x16xf32>
    %125 = arith.addf %115, %124 : vector<2x8x16xf32>
    %126 = vector.extract_strided_slice %125 {offsets = [0, 0, 0], sizes = [1, 8, 16], strides = [1, 1, 1]} : vector<2x8x16xf32> to vector<1x8x16xf32>
    %127 = vector.shape_cast %126 : vector<1x8x16xf32> to vector<8x16xf32>
    %128 = vector.extract_strided_slice %125 {offsets = [0, 0, 0], sizes = [1, 8, 16], strides = [1, 1, 1]} : vector<2x8x16xf32> to vector<1x8x16xf32>
    %129 = vector.shape_cast %128 : vector<1x8x16xf32> to vector<8x16xf32>
    %130 = vector.extract_strided_slice %125 {offsets = [0, 0, 0], sizes = [1, 8, 16], strides = [1, 1, 1]} : vector<2x8x16xf32> to vector<1x8x16xf32>
    %131 = vector.shape_cast %130 : vector<1x8x16xf32> to vector<8x16xf32>
    %132 = arith.mulf %129, %131 : vector<8x16xf32>
    %133 = vector.extract_strided_slice %125 {offsets = [1, 0, 0], sizes = [1, 8, 16], strides = [1, 1, 1]} : vector<2x8x16xf32> to vector<1x8x16xf32>
    %134 = vector.shape_cast %133 : vector<1x8x16xf32> to vector<8x16xf32>
    %135 = arith.addf %127, %134 : vector<8x16xf32>
    %136 = arith.mulf %134, %134 : vector<8x16xf32>
    %137 = arith.addf %132, %136 : vector<8x16xf32>
    %cst_92 = arith.constant dense<0.000000e+00> : vector<8xf32>
    %138 = vector.multi_reduction <add>, %135, %cst_92 [1] : vector<8x16xf32> to vector<8xf32>
    %139 = vector.shape_cast %138 : vector<8xf32> to vector<8x1xf32>
    %140 = vector.shape_cast %139 : vector<8x1xf32> to vector<1x8x1xf32>
    %c0_93 = arith.constant 0 : index
    %c0_94 = arith.constant 0 : index
    %c0_95 = arith.constant 0 : index
    %141 = vector.load %arg3[%c0_93, %c0_94, %c0_95] : memref<1x8x1xf32, #tpu.memory_space<vmem>>, vector<1x8x1xf32>
    tpu.vector_store %arg3[%c0_93, %c0_94, %c0_95], %140 {strides = array<i32>} : memref<1x8x1xf32, #tpu.memory_space<vmem>>, vector<1x8x1xf32>,
    %cst_96 = arith.constant dense<0.000000e+00> : vector<8xf32>
    %142 = vector.multi_reduction <add>, %137, %cst_96 [1] : vector<8x16xf32> to vector<8xf32>
    %143 = vector.shape_cast %142 : vector<8xf32> to vector<8x1xf32>
    %144 = vector.shape_cast %143 : vector<8x1xf32> to vector<1x8x1xf32>
    %c0_97 = arith.constant 0 : index
    %c0_98 = arith.constant 0 : index
    %c0_99 = arith.constant 0 : index
    %145 = vector.load %arg4[%c0_97, %c0_98, %c0_99] : memref<1x8x1xf32, #tpu.memory_space<vmem>>, vector<1x8x1xf32>
    tpu.vector_store %arg4[%c0_97, %c0_98, %c0_99], %144 {strides = array<i32>} : memref<1x8x1xf32, #tpu.memory_space<vmem>>, vector<1x8x1xf32>,
    return
  }
  func.func @transform_0(%arg0: i32) -> (i32, i32, i32) {
    %c0_i32 = arith.constant 0 : i32
    %c0_i32_0 = arith.constant 0 : i32
    %c0_i32_1 = arith.constant 0 : i32
    return %arg0, %c0_i32, %c0_i32_0 : i32, i32, i32
  }
  func.func @transform_1(%arg0: i32) -> (i32, i32, i32, i32) {
    %c0_i32 = arith.constant 0 : i32
    %c0_i32_0 = arith.constant 0 : i32
    %c0_i32_1 = arith.constant 0 : i32
    %c0_i32_2 = arith.constant 0 : i32
    %c0_i32_3 = arith.constant 0 : i32
    return %c0_i32, %c0_i32_0, %c0_i32_1, %c0_i32_2 : i32, i32, i32, i32
  }
  func.func @transform_2(%arg0: i32) -> (i32, i32, i32) {
    %c0_i32 = arith.constant 0 : i32
    %c0_i32_0 = arith.constant 0 : i32
    %c0_i32_1 = arith.constant 0 : i32
    return %arg0, %c0_i32, %c0_i32_0 : i32, i32, i32
  }
  func.func @transform_3(%arg0: i32) -> (i32, i32, i32) {
    %c0_i32 = arith.constant 0 : i32
    %c0_i32_0 = arith.constant 0 : i32
    %c0_i32_1 = arith.constant 0 : i32
    return %arg0, %c0_i32, %c0_i32_0 : i32, i32, i32
  }
}

</mosaic_0001>

<llo_original>
// kernel: tpu_custom_call.1
$region0: #{tpu_custom_call.1}
  #allocation0 [shape = 'u32[]', space=smem, size = 0x4, offset = 0x4, fixed_abs, tag = 'smem constant byte address 0x4 - core index']
  #allocation1 [shape = 'u32[144,128]{1,0:T(1,128)}', space=vmem, size = 0x12000, scoped, tag = 'internal scratch']
  #allocation2 [shape = 'f32[2,4,18]{2,1,0:T(4,128)}', space=vmem, size = 0x1000, scoped, tag = 'scratch operand']
  %s0 = inlined_call_operand.vmem [shape: f32[2,4,16], index: 0, kind: input, shape index: {}]
  %s1 = inlined_call_operand.vmem [shape: f32[4,3,8,1], index: 1, kind: input, shape index: {}]
  %s2 = inlined_call_operand.vmem [shape: f32[1,8,1], index: 2, kind: output, shape index: {0}]
  %s3 = inlined_call_operand.vmem [shape: f32[1,8,1], index: 3, kind: output, shape index: {1}]
  %4 = xla_tuple %s2, %s3
  %s5 = sld [smem:[#allocation0]]
  $region26: #{tpu_custom_call.1} parent=0
    _
  %s7 = ssub.s32 1, %s5
  %s8 = scalar_select 0, %s7, %s5
  // Predicated region
  $region2: #{tpu_custom_call.1} parent=0 // pred_check
    _
  $region3: #{tpu_custom_call.1} parent=0 // pred_check_branch
    %10 = sbr.rel (0) target = $region5
  $region4: #{tpu_custom_call.1} parent=0 // pred_region
    _
  $region5: #{tpu_custom_call.1} parent=0 // pred_fallthru
    _
  // Predicated region
  $region6: #{tpu_custom_call.1} parent=0 // pred_check
    _
  $region7: #{tpu_custom_call.1} parent=0 // pred_check_branch
    %12 = sbr.rel (0) target = $region9
  $region8: #{tpu_custom_call.1} parent=0 // pred_region
    _
  $region9: #{tpu_custom_call.1} parent=0 // pred_fallthru
    _
  %vm13 = vcmask 3072
  %14 = vst.msk [vmem:[#allocation2] sm:$0xf] %vm13, 0.0
  %15 = vst.msk [vmem:[#allocation2 + $0x4] sm:$0xf] %vm13, 0.0
  %vm16 = vcmask 142472
  %17 = vst.msk [vmem:[#allocation2] sm:$0xf] %vm16, 0.0
  %18 = vst.msk [vmem:[#allocation2 + $0x4] sm:$0xf] %vm16, 0.0
  %v19 = vld [vmem:[%s0] sm:$0xf]
  %v20 = vld [vmem:[%s0 + $0x4] sm:$0xf]
  %23 = vrot.lane.b32.xlu0 %v19, 1
  %v24 = vpop.permute.xlu0 %23
  %25 = vrot.lane.b32.xlu0 %v20, 1
  %v26 = vpop.permute.xlu0 %25
  %vm29 = vcmask 134152
  %30 = vst.msk [vmem:[#allocation2] sm:$0xf] %vm29, %v24
  %31 = vst.msk [vmem:[#allocation2 + $0x4] sm:$0xf] %vm29, %v26
  %v32 = vld [vmem:[#allocation2] sm:$0x1]
  %v33 = vld [vmem:[#allocation2 + $0x4] sm:$0x1]
  %v34 = vld [vmem:[%s1] sm:$0xff]
  %36 = vset.pattern.permute.xlu0 0
  %37 = vperm.xlu0 %36, %v34
  %v38 = vpop.permute.xlu0 %37
  %v40 = vlaneseq
  %v41 = vshrl.u32 %v40, 7
  %v42 = vsub.s32 0, %v41
  %v43 = vrot.slane %v32, %v42
  %v44 = vlaneseq
  %v45 = vshrl.u32 %v44, 7
  %v46 = vsub.s32 0, %v45
  %v47 = vrot.slane %v33, %v46
  %v48 = vmul.f32 %v38, %v43
  %v49 = vmul.f32 %v38, %v47
  %v50 = vadd.f32 %v48, 0.0
  %v51 = vadd.f32 %v49, 0.0
  %s52 = scalar_lea.vmem %s1, 8
  %v53 = vld [vmem:[%s52] sm:$0xff]
  %55 = vset.pattern.permute.xlu0 0
  %56 = vperm.xlu0 %55, %v53
  %v57 = vpop.permute.xlu0 %56
  %v59 = vmul.f32 %v57, %v43
  %v60 = vmul.f32 %v57, %v47
  %63 = vrot.lane.b32.xlu0 %v59, 127
  %v64 = vpop.permute.xlu0 %63
  %65 = vrot.lane.b32.xlu0 %v60, 127
  %v66 = vpop.permute.xlu0 %65
  %v69 = vadd.f32 %v50, %v64
  %v70 = vadd.f32 %v51, %v66
  %s71 = scalar_lea.vmem %s1, 16
  %v72 = vld [vmem:[%s71] sm:$0xff]
  %74 = vset.pattern.permute.xlu0 0
  %75 = vperm.xlu0 %74, %v72
  %v76 = vpop.permute.xlu0 %75
  %v78 = vmul.f32 %v76, %v43
  %v79 = vmul.f32 %v76, %v47
  %82 = vrot.lane.b32.xlu0 %v78, 126
  %v83 = vpop.permute.xlu0 %82
  %84 = vrot.lane.b32.xlu0 %v79, 126
  %v85 = vpop.permute.xlu0 %84
  %v88 = vadd.f32 %v69, %v83
  %v89 = vadd.f32 %v70, %v85
  %v90 = vld [vmem:[#allocation2 + $0x1] sm:$0x1]
  %v91 = vld [vmem:[#allocation2 + $0x5] sm:$0x1]
  %s92 = scalar_lea.vmem %s1, 24
  %v93 = vld [vmem:[%s92] sm:$0xff]
  %95 = vset.pattern.permute.xlu0 0
  %96 = vperm.xlu0 %95, %v93
  %v97 = vpop.permute.xlu0 %96
  %v99 = vlaneseq
  %v100 = vshrl.u32 %v99, 7
  %v101 = vsub.s32 0, %v100
  %v102 = vrot.slane %v90, %v101
  %v103 = vlaneseq
  %v104 = vshrl.u32 %v103, 7
  %v105 = vsub.s32 0, %v104
  %v106 = vrot.slane %v91, %v105
  %v107 = vmul.f32 %v97, %v102
  %v108 = vmul.f32 %v97, %v106
  %v109 = vadd.f32 %v88, %v107
  %v110 = vadd.f32 %v89, %v108
  %s111 = scalar_lea.vmem %s1, 32
  %v112 = vld [vmem:[%s111] sm:$0xff]
  %114 = vset.pattern.permute.xlu0 0
  %115 = vperm.xlu0 %114, %v112
  %v116 = vpop.permute.xlu0 %115
  %v118 = vmul.f32 %v116, %v102
  %v119 = vmul.f32 %v116, %v106
  %122 = vrot.lane.b32.xlu0 %v118, 127
  %v123 = vpop.permute.xlu0 %122
  %124 = vrot.lane.b32.xlu0 %v119, 127
  %v125 = vpop.permute.xlu0 %124
  %v128 = vadd.f32 %v109, %v123
  %v129 = vadd.f32 %v110, %v125
  %s130 = scalar_lea.vmem %s1, 40
  %v131 = vld [vmem:[%s130] sm:$0xff]
  %133 = vset.pattern.permute.xlu0 0
  %134 = vperm.xlu0 %133, %v131
  %v135 = vpop.permute.xlu0 %134
  %v137 = vmul.f32 %v135, %v102
  %v138 = vmul.f32 %v135, %v106
  %141 = vrot.lane.b32.xlu0 %v137, 126
  %v142 = vpop.permute.xlu0 %141
  %143 = vrot.lane.b32.xlu0 %v138, 126
  %v144 = vpop.permute.xlu0 %143
  %v147 = vadd.f32 %v128, %v142
  %v148 = vadd.f32 %v129, %v144
  %v149 = vld [vmem:[#allocation2 + $0x2] sm:$0x1]
  %v150 = vld [vmem:[#allocation2 + $0x6] sm:$0x1]
  %s151 = scalar_lea.vmem %s1, 48
  %v152 = vld [vmem:[%s151] sm:$0xff]
  %154 = vset.pattern.permute.xlu0 0
  %155 = vperm.xlu0 %154, %v152
  %v156 = vpop.permute.xlu0 %155
  %v158 = vlaneseq
  %v159 = vshrl.u32 %v158, 7
  %v160 = vsub.s32 0, %v159
  %v161 = vrot.slane %v149, %v160
  %v162 = vlaneseq
  %v163 = vshrl.u32 %v162, 7
  %v164 = vsub.s32 0, %v163
  %v165 = vrot.slane %v150, %v164
  %v166 = vmul.f32 %v156, %v161
  %v167 = vmul.f32 %v156, %v165
  %v168 = vadd.f32 %v147, %v166
  %v169 = vadd.f32 %v148, %v167
  %s170 = scalar_lea.vmem %s1, 56
  %v171 = vld [vmem:[%s170] sm:$0xff]
  %173 = vset.pattern.permute.xlu0 0
  %174 = vperm.xlu0 %173, %v171
  %v175 = vpop.permute.xlu0 %174
  %v177 = vmul.f32 %v175, %v161
  %v178 = vmul.f32 %v175, %v165
  %181 = vrot.lane.b32.xlu0 %v177, 127
  %v182 = vpop.permute.xlu0 %181
  %183 = vrot.lane.b32.xlu0 %v178, 127
  %v184 = vpop.permute.xlu0 %183
  %v187 = vadd.f32 %v168, %v182
  %v188 = vadd.f32 %v169, %v184
  %s189 = scalar_lea.vmem %s1, 64
  %v190 = vld [vmem:[%s189] sm:$0xff]
  %192 = vset.pattern.permute.xlu0 0
  %193 = vperm.xlu0 %192, %v190
  %v194 = vpop.permute.xlu0 %193
  %v196 = vmul.f32 %v194, %v161
  %v197 = vmul.f32 %v194, %v165
  %200 = vrot.lane.b32.xlu0 %v196, 126
  %v201 = vpop.permute.xlu0 %200
  %202 = vrot.lane.b32.xlu0 %v197, 126
  %v203 = vpop.permute.xlu0 %202
  %v206 = vadd.f32 %v187, %v201
  %v207 = vadd.f32 %v188, %v203
  %v208 = vld [vmem:[#allocation2 + $0x3] sm:$0x1]
  %v209 = vld [vmem:[#allocation2 + $0x7] sm:$0x1]
  %s210 = scalar_lea.vmem %s1, 72
  %v211 = vld [vmem:[%s210] sm:$0xff]
  %213 = vset.pattern.permute.xlu0 0
  %214 = vperm.xlu0 %213, %v211
  %v215 = vpop.permute.xlu0 %214
  %v217 = vlaneseq
  %v218 = vshrl.u32 %v217, 7
  %v219 = vsub.s32 0, %v218
  %v220 = vrot.slane %v208, %v219
  %v221 = vlaneseq
  %v222 = vshrl.u32 %v221, 7
  %v223 = vsub.s32 0, %v222
  %v224 = vrot.slane %v209, %v223
  %v225 = vmul.f32 %v215, %v220
  %v226 = vmul.f32 %v215, %v224
  %v227 = vadd.f32 %v206, %v225
  %v228 = vadd.f32 %v207, %v226
  %s229 = scalar_lea.vmem %s1, 80
  %v230 = vld [vmem:[%s229] sm:$0xff]
  %232 = vset.pattern.permute.xlu0 0
  %233 = vperm.xlu0 %232, %v230
  %v234 = vpop.permute.xlu0 %233
  %v236 = vmul.f32 %v234, %v220
  %v237 = vmul.f32 %v234, %v224
  %240 = vrot.lane.b32.xlu0 %v236, 127
  %v241 = vpop.permute.xlu0 %240
  %242 = vrot.lane.b32.xlu0 %v237, 127
  %v243 = vpop.permute.xlu0 %242
  %v246 = vadd.f32 %v227, %v241
  %v247 = vadd.f32 %v228, %v243
  %s248 = scalar_lea.vmem %s1, 88
  %v249 = vld [vmem:[%s248] sm:$0xff]
  %251 = vset.pattern.permute.xlu0 0
  %252 = vperm.xlu0 %251, %v249
  %v253 = vpop.permute.xlu0 %252
  %v255 = vmul.f32 %v253, %v220
  %v256 = vmul.f32 %v253, %v224
  %259 = vrot.lane.b32.xlu0 %v255, 126
  %v260 = vpop.permute.xlu0 %259
  %261 = vrot.lane.b32.xlu0 %v256, 126
  %v262 = vpop.permute.xlu0 %261
  %v265 = vadd.f32 %v246, %v260
  %v266 = vadd.f32 %v247, %v262
  %v267 = vmul.f32 %v265, %v265
  %v268 = vadd.f32 %v265, %v266
  %v269 = vmul.f32 %v266, %v266
  %v270 = vadd.f32 %v267, %v269
  %vm271 = vcmask 130048
  %v272 = vsel %vm271, %v268, 0.0
  %273 = vadd.xlane.f32.xlu0 %v272
  %v274 = vpop.xlane.xlu0 %273
  %vm275 = vcmask 7168
  %276 = vst.msk [vmem:[%s2] sm:$0xff] %vm275, %v274
  %v277 = vsel %vm271, %v270, 0.0
  %278 = vadd.xlane.f32.xlu0 %v277
  %v279 = vpop.xlane.xlu0 %278
  %280 = vst.msk [vmem:[%s3] sm:$0xff] %vm275, %v279
  // Predicated region
  $region10: #{tpu_custom_call.1} parent=0 // pred_check
    _
  $region11: #{tpu_custom_call.1} parent=0 // pred_check_branch
    %282 = sbr.rel (0) target = $region13
  $region12: #{tpu_custom_call.1} parent=0 // pred_region
    _
  $region13: #{tpu_custom_call.1} parent=0 // pred_fallthru
    _
  // Predicated region
  $region14: #{tpu_custom_call.1} parent=0 // pred_check
    _
  $region15: #{tpu_custom_call.1} parent=0 // pred_check_branch
    %284 = sbr.rel (0) target = $region17
  $region16: #{tpu_custom_call.1} parent=0 // pred_region
    _
  $region17: #{tpu_custom_call.1} parent=0 // pred_fallthru
    _
  // Predicated region
  $region18: #{tpu_custom_call.1} parent=0 // pred_check
    _
  $region19: #{tpu_custom_call.1} parent=0 // pred_check_branch
    %286 = sbr.rel (0) target = $region21
  $region20: #{tpu_custom_call.1} parent=0 // pred_region
    _
  $region21: #{tpu_custom_call.1} parent=0 // pred_fallthru
    _
  // Predicated region
  $region22: #{tpu_custom_call.1} parent=0 // pred_check
    _
  $region23: #{tpu_custom_call.1} parent=0 // pred_check_branch
    %288 = sbr.rel (0) target = $region25
  $region24: #{tpu_custom_call.1} parent=0 // pred_region
    _
  $region25: #{tpu_custom_call.1} parent=0 // pred_fallthru
    _

</llo_original>
